<compile_context>
chip_gen: v6e
topology: v6e:2x2x1
jax: 0.10.0
libtpu: 0.0.40
codegen_flags: <defaults>
</compile_context>

<pallas_src>
import functools

import jax
import jax.numpy as jnp
from jax.experimental import pallas as pl
from jax.experimental.pallas import tpu as pltpu


def _round_up(x, m):
    return ((x + m - 1) // m) * m


# ----------------------------------------------------------------------------
# Kernel 1: torchaudio.functional.add_noise
# ----------------------------------------------------------------------------
def _add_noise_fused_kernel(clean_ref, noise_ref, out_ref, *, snr_scale):
    c = clean_ref[...]
    n = noise_ref[...]
    e_sig = jnp.sum(c * c, axis=-1, keepdims=True)
    e_noise = jnp.maximum(jnp.sum(n * n, axis=-1, keepdims=True), 1e-30)
    scale = jnp.sqrt(e_sig / e_noise) * snr_scale     # == 10^((snr_orig-snr)/20)
    out_ref[...] = c + scale * n


def _scale_kernel(clean_ref, noise_ref, scale_ref, es_scr, en_scr, *, snr_scale):
    @pl.when(pl.program_id(0) == 0)
    def _():
        es_scr[...] = jnp.zeros_like(es_scr)
        en_scr[...] = jnp.zeros_like(en_scr)

    c = clean_ref[...]
    n = noise_ref[...]
    es_scr[...] += jnp.sum(c * c, axis=-1, keepdims=True)
    en_scr[...] += jnp.sum(n * n, axis=-1, keepdims=True)

    @pl.when(pl.program_id(0) == pl.num_programs(0) - 1)
    def _():
        scale_ref[...] = jnp.sqrt(
            es_scr[...] / jnp.maximum(en_scr[...], 1e-30)) * snr_scale


def _mix_kernel(clean_ref, noise_ref, scale_ref, out_ref):
    out_ref[...] = clean_ref[...] + scale_ref[...] * noise_ref[...]


def add_noise(clean_audio, noise, snr_db):
    B, L = clean_audio.shape
    snr_scale = float(10.0 ** (-float(snr_db) / 20.0))

    # Fused single-pass kernel when clean + noise + out fit easily in VMEM.
    if B * L * 4 * 3 <= 8 * 1024 * 1024:
        return pl.pallas_call(
            functools.partial(_add_noise_fused_kernel, snr_scale=snr_scale),
            out_shape=jax.ShapeDtypeStruct((B, L), jnp.float32),
        )(clean_audio, noise)

    # Long-audio fallback: pass A computes the per-row scale once,
    # pass B does the memory-bound mix with large L-chunks.
    Lc = next((c for c in (16384, 8192, 4096, 2048, 1024) if L % c == 0), L)
    n_chunks = L // Lc
    scale = pl.pallas_call(
        functools.partial(_scale_kernel, snr_scale=snr_scale),
        out_shape=jax.ShapeDtypeStruct((B, 1), jnp.float32),
        grid_spec=pltpu.PrefetchScalarGridSpec(
            num_scalar_prefetch=0,
            grid=(n_chunks,),
            in_specs=[pl.BlockSpec((B, Lc), lambda i: (0, i)),
                      pl.BlockSpec((B, Lc), lambda i: (0, i))],
            out_specs=pl.BlockSpec((B, 1), lambda i: (0, 0)),
            scratch_shapes=[pltpu.VMEM((B, 1), jnp.float32),
                            pltpu.VMEM((B, 1), jnp.float32)]),
        compiler_params=pltpu.CompilerParams(
            dimension_semantics=("arbitrary",)),
    )(clean_audio, noise)
    return pl.pallas_call(
        _mix_kernel,
        out_shape=jax.ShapeDtypeStruct((B, L), jnp.float32),
        grid_spec=pltpu.PrefetchScalarGridSpec(
            num_scalar_prefetch=0,
            grid=(n_chunks,),
            in_specs=[pl.BlockSpec((B, Lc), lambda i: (0, i)),
                      pl.BlockSpec((B, Lc), lambda i: (0, i)),
                      pl.BlockSpec((B, 1), lambda i: (0, 0))],
            out_specs=pl.BlockSpec((B, Lc), lambda i: (0, i))),
        compiler_params=pltpu.CompilerParams(
            dimension_semantics=("parallel",)),
    )(clean_audio, noise, scale)


# ----------------------------------------------------------------------------
# Kernel 2: generic tiled linear  y = x @ W + b
# (used for the hoisted LSTM input projection and the articulatory decoder)
# ----------------------------------------------------------------------------
def _linear_kernel(x_ref, w_ref, b_ref, o_ref):
    o_ref[...] = (jnp.dot(x_ref[...], w_ref[...],
                          preferred_element_type=jnp.float32)
                  + b_ref[...])


def linear(x2d, w, b):
    """x2d: [N, D], w: [D, O], b: [O].

    Rows are tiled with a tile that divides N (no activation pad/slice
    round-trip when N is a multiple of 8, which it always is here); output
    columns are padded to a 128 multiple (lane-dense stores) and tiled so the
    per-step weight block stays small (v7x 64 MiB VMEM budget)."""
    N, D = x2d.shape
    O = w.shape[1]
    Op = _round_up(O, 128)

    row_tile = next((t for t in (512, 256, 128, 64, 32, 16, 8) if N % t == 0),
                    None)
    if row_tile is None:            # ragged row count: minimal pad to 8 rows
        Np = _round_up(N, 8)
        x2d = jnp.pad(x2d, ((0, Np - N), (0, 0)))
        row_tile = 8
    else:
        Np = N
    col_tile = next(t for t in (512, 256, 128) if Op % t == 0)

    wp = jnp.pad(w, ((0, 0), (0, Op - O))) if Op != O else w
    bp = b.reshape(1, O)
    if Op != O:
        bp = jnp.pad(bp, ((0, 0), (0, Op - O)))

    out = pl.pallas_call(
        _linear_kernel,
        out_shape=jax.ShapeDtypeStruct((Np, Op), jnp.float32),
        grid_spec=pltpu.PrefetchScalarGridSpec(
            num_scalar_prefetch=0,
            grid=(Np // row_tile, Op // col_tile),
            in_specs=[pl.BlockSpec((row_tile, D), lambda i, j: (i, 0)),
                      pl.BlockSpec((D, col_tile), lambda i, j: (0, j)),
                      pl.BlockSpec((1, col_tile), lambda i, j: (0, j))],
            out_specs=pl.BlockSpec((row_tile, col_tile), lambda i, j: (i, j))),
        compiler_params=pltpu.CompilerParams(
            dimension_semantics=("parallel", "parallel"),
            vmem_limit_bytes=32 * 1024 * 1024),
    )(x2d, wp, bp)
    if Np != N or Op != O:
        out = out[:N, :O]
    return out


# ----------------------------------------------------------------------------
# Kernel 3: fused bidirectional LSTM layer, T-chunked grid.
# xproj gate layout (per timestep): [i_f,i_b | f_f,f_b | g_f,g_b | o_f,o_b],
# each block Hp lanes wide; the *_b columns were pre-reversed in time outside
# the kernel, so step s drives the forward direction with time s and the
# backward direction with time T-1-s while reading a single slab row.
# Whh_cat is block-diagonal [2Hp, 8Hp] (h_f rows -> *_f cols, h_b -> *_b), so
# both directions share one MXU matmul per step.  h/c live in vregs via the
# fori_loop carry and persist across T-chunks in VMEM scratch.
# ----------------------------------------------------------------------------
def _bilstm_kernel(xp_ref, whh_ref, out_ref, h_scr, c_scr):
    tc = xp_ref.shape[0]
    H2 = h_scr.shape[-1]                    # 2 * Hp (multiple of 128)

    @pl.when(pl.program_id(0) == 0)
    def _():
        h_scr[...] = jnp.zeros_like(h_scr)
        c_scr[...] = jnp.zeros_like(c_scr)

    def step(s, carry):
        h, c = carry
        gates = xp_ref[s] + jnp.dot(h, whh_ref[...],
                                    preferred_element_type=jnp.float32)
        i = jax.nn.sigmoid(gates[:, 0 * H2:1 * H2])
        f = jax.nn.sigmoid(gates[:, 1 * H2:2 * H2])
        g = jnp.tanh(gates[:, 2 * H2:3 * H2])
        o = jax.nn.sigmoid(gates[:, 3 * H2:4 * H2])
        c = f * c + i * g                   # [Bp, 2Hp]
        h = o * jnp.tanh(c)
        out_ref[pl.ds(s, 1), :, :] = h[None]   # single lane-dense store / step
        return (h, c)

    h, c = jax.lax.fori_loop(0, tc, step, (h_scr[...], c_scr[...]))
    h_scr[...] = h                           # persist across T-chunks
    c_scr[...] = c


def _pick_time_chunk(T):
    return next((t for t in (128, 64, 32, 16, 8) if T % t == 0), T)


def bilstm_layer(xproj_tbg, whh_cat):
    T, Bp, G = xproj_tbg.shape               # G = 8 * Hp
    H2 = whh_cat.shape[0]                    # 2 * Hp
    tc = _pick_time_chunk(T)
    return pl.pallas_call(
        _bilstm_kernel,
        out_shape=jax.ShapeDtypeStruct((T, Bp, H2), jnp.float32),
        grid_spec=pltpu.PrefetchScalarGridSpec(
            num_scalar_prefetch=0,
            grid=(T // tc,),
            in_specs=[pl.BlockSpec((tc, Bp, G), lambda i: (i, 0, 0)),
                      pl.BlockSpec((H2, G), lambda i: (0, 0))],
            out_specs=pl.BlockSpec((tc, Bp, H2), lambda i: (i, 0, 0)),
            scratch_shapes=[pltpu.VMEM((Bp, H2), jnp.float32),   # h (fwd|bwd)
                            pltpu.VMEM((Bp, H2), jnp.float32)]), # c (fwd|bwd)
        compiler_params=pltpu.CompilerParams(
            dimension_semantics=("arbitrary",),
            vmem_limit_bytes=32 * 1024 * 1024),
    )(xproj_tbg, whh_cat)


# ----------------------------------------------------------------------------
# Parameter construction (deterministic, PyTorch-LSTM-style uniform init)
# ----------------------------------------------------------------------------
def init_params(key, input_size, hidden, num_layers, sparc_dim):
    k = 1.0 / jnp.sqrt(jnp.float32(hidden))
    layers = []
    for layer in range(num_layers):
        d_in = input_size if layer == 0 else 2 * hidden
        lp = {}
        for d in ("f", "b"):
            key, k1, k2, k3, k4 = jax.random.split(key, 5)
            lp[f"wih_{d}"] = jax.random.uniform(
                k1, (4 * hidden, d_in), jnp.float32, -k, k)
            lp[f"whh_{d}"] = jax.random.uniform(
                k2, (4 * hidden, hidden), jnp.float32, -k, k)
            bih = jax.random.uniform(k3, (4 * hidden,), jnp.float32, -k, k)
            bhh = jax.random.uniform(k4, (4 * hidden,), jnp.float32, -k, k)
            lp[f"b_{d}"] = bih + bhh
        layers.append(lp)
    key, k1, k2 = jax.random.split(key, 3)
    kd = 1.0 / jnp.sqrt(jnp.float32(2 * hidden))
    w_dec = jax.random.uniform(k1, (sparc_dim, 2 * hidden), jnp.float32, -kd, kd)
    b_dec = jax.random.uniform(k2, (sparc_dim,), jnp.float32, -kd, kd)
    return layers, w_dec, b_dec


def _fuse_bilstm_layer(lp, H, Hp, in_blocks, in_dim_pad):
    """Fused gate-major weights [i_f,i_b | f_f,f_b | g_f,g_b | o_f,o_b].

    Each gate/direction block is Hp lanes wide (Hp = H rounded up to 64) so
    every kernel slice / store is a 128-lane multiple; the padded lanes stay
    exactly zero through the recurrence (zero wih/whh/bias columns)."""
    wih_cat = jnp.zeros((in_dim_pad, 8 * Hp), jnp.float32)
    whh_cat = jnp.zeros((2 * Hp, 8 * Hp), jnp.float32)
    b_cat = jnp.zeros((8 * Hp,), jnp.float32)
    for g in range(4):
        for di, d in enumerate(("f", "b")):
            col = (2 * g + di) * Hp
            w_g = lp[f"wih_{d}"][g * H:(g + 1) * H, :]       # [H, d_in_raw]
            for (rs, re, ps) in in_blocks:                   # raw->padded rows
                wih_cat = wih_cat.at[ps:ps + (re - rs), col:col + H].set(
                    w_g[:, rs:re].T)
            whh_cat = whh_cat.at[di * Hp:di * Hp + H, col:col + H].set(
                lp[f"whh_{d}"][g * H:(g + 1) * H, :].T)
            b_cat = b_cat.at[col:col + H].set(lp[f"b_{d}"][g * H:(g + 1) * H])
    return {"wih_cat": wih_cat, "whh_cat": whh_cat, "b_cat": b_cat}


def prepare_pallas_params(raw_layers, w_dec, b_dec, hidden, input_size):
    H = hidden
    Hp = _round_up(H, 64)               # lane-aligned per-gate / per-dir width
    lstm = []
    for li, lp in enumerate(raw_layers):
        if li == 0:
            in_blocks = [(0, input_size, 0)]
            in_dim_pad = input_size
        else:                           # input is previous layer's [h_f | h_b]
            in_blocks = [(0, H, 0), (H, 2 * H, Hp)]
            in_dim_pad = 2 * Hp
        lstm.append(_fuse_bilstm_layer(lp, H, Hp, in_blocks, in_dim_pad))
    sparc_dim = w_dec.shape[0]
    w_dec_t = jnp.zeros((2 * Hp, sparc_dim), jnp.float32)
    w_dec_t = w_dec_t.at[0:H, :].set(w_dec[:, 0:H].T)
    w_dec_t = w_dec_t.at[Hp:Hp + H, :].set(w_dec[:, H:2 * H].T)
    return {"lstm": lstm, "w_dec_t": w_dec_t, "b_dec": b_dec, "Hp": Hp}


# ----------------------------------------------------------------------------
# Forward pass (mirrors ArticulatoryEnhancementModel.forward)
# ----------------------------------------------------------------------------
def forward(video, clean_audio, noise, avhubert_features, clean_articulatory,
            noisy_articulatory, pallas_params, hidden, snr_db=10.0):
    # TODO(synk): AVHubert / SPARC / Whisper are frozen pretrained models with
    # no Pallas equivalent; their outputs (avhubert_features,
    # clean/noisy_articulatory) are supplied as inputs here.
    del video  # only consumed by AVHubert
    noisy_audio = add_noise(clean_audio, noise, snr_db)

    combined = jnp.concatenate([avhubert_features, noisy_articulatory], axis=-1)
    B, T, _ = combined.shape
    Bp = _round_up(B, 8)                           # pad batch to 8 sublanes
    x = jnp.transpose(combined, (1, 0, 2))         # [T, B, D0]
    x = jnp.pad(x, ((0, 0), (0, Bp - B), (0, 0)))  # [T, Bp, D0]

    Hp = pallas_params["Hp"]
    for lp in pallas_params["lstm"]:
        T_, Bp_, D = x.shape
        # hoisted input projection: all timesteps, both directions, + bias
        xproj = linear(x.reshape(T_ * Bp_, D), lp["wih_cat"], lp["b_cat"])
        xproj = xproj.reshape(T_, Bp_, 4, 2, Hp)
        # pre-reverse the backward-direction gate columns along time so the
        # recurrent kernel reads one slab row per step (no per-step select)
        xproj = jnp.stack(
            [xproj[:, :, :, 0, :], xproj[::-1, :, :, 1, :]],
            axis=3).reshape(T_, Bp_, 8 * Hp)
        out = bilstm_layer(xproj, lp["whh_cat"])   # [T, Bp, 2Hp]; bwd half is
                                                   # stored in reversed time
        # undo the backward-half time reversal (single XLA reverse + concat)
        x = jnp.concatenate([out[:, :, :Hp], out[::-1, :, Hp:]], axis=-1)
        # TODO(synk): inter-layer dropout (p=0.1) omitted (inference).

    pred = linear(x.reshape(T * Bp, 2 * Hp),
                  pallas_params["w_dec_t"], pallas_params["b_dec"])
    pred = pred.reshape(T, Bp, -1)[:, :B, :]
    predicted_articulatory = jnp.transpose(pred, (1, 0, 2))   # [B, T, sparc]

    return {
        "predicted_articulatory": predicted_articulatory,
        "clean_articulatory": clean_articulatory,
        "noisy_audio": noisy_audio,
        "clean_audio": clean_audio,
        "avhubert_features": avhubert_features,
    }


# ----------------------------------------------------------------------------
# Pure-JAX reference for correctness checking
# ----------------------------------------------------------------------------
def _ref_lstm_dir(x_tbd, wih, whh, b, hidden, reverse):
    xs = x_tbd[::-1] if reverse else x_tbd
    B = x_tbd.shape[1]
    wih_t, whh_t = wih.T, whh.T

    def step(carry, xt):
        h, c = carry
        gates = xt @ wih_t + h @ whh_t + b
        i = jax.nn.sigmoid(gates[:, :hidden])
        f = jax.nn.sigmoid(gates[:, hidden:2 * hidden])
        g = jnp.tanh(gates[:, 2 * hidden:3 * hidden])
        o = jax.nn.sigmoid(gates[:, 3 * hidden:])
        c = f * c + i * g
        h = o * jnp.tanh(c)
        return (h, c), h

    init = (jnp.zeros((B, hidden), jnp.float32),
            jnp.zeros((B, hidden), jnp.float32))
    _, ys = jax.lax.scan(step, init, xs)
    return ys[::-1] if reverse else ys


def _ref_forward(clean_audio, noise, avhubert_features, noisy_articulatory,
                 raw_layers, w_dec, b_dec, hidden, snr_db):
    e_s = jnp.sum(clean_audio ** 2, axis=-1, keepdims=True)
    e_n = jnp.sum(noise ** 2, axis=-1, keepdims=True)
    scale = 10.0 ** ((10.0 * (jnp.log10(e_s) - jnp.log10(e_n)) - snr_db) / 20.0)
    noisy_audio = clean_audio + scale * noise

    x = jnp.transpose(
        jnp.concatenate([avhubert_features, noisy_articulatory], -1), (1, 0, 2))
    for lp in raw_layers:
        f = _ref_lstm_dir(x, lp["wih_f"], lp["whh_f"], lp["b_f"], hidden, False)
        b = _ref_lstm_dir(x, lp["wih_b"], lp["whh_b"], lp["b_b"], hidden, True)
        x = jnp.concatenate([f, b], axis=-1)
    lstm_out = jnp.transpose(x, (1, 0, 2))
    pred = lstm_out @ w_dec.T + b_dec
    return pred, noisy_audio


# ----------------------------------------------------------------------------
if __name__ == "__main__":
    B, T = 2, 8
    AVHUBERT_DIM = 52        # stand-in for av_hubert.encoder.embedding_dim
    SPARC_DIM = 12
    HIDDEN = 64              # lane-aligned small stand-in for hidden_dim=512
    NUM_LAYERS = 2
    AUDIO_LEN = 1024
    SNR_DB = 10.0

    key = jax.random.PRNGKey(0)
    key, kv, ka, kn, kf, kca, kna, kp = jax.random.split(key, 8)

    video = jax.random.normal(kv, (B, 1, T, 16, 16), jnp.float32)   # unused
    clean_audio = jax.random.normal(ka, (B, AUDIO_LEN), jnp.float32)
    noise = jax.random.normal(kn, (B, AUDIO_LEN), jnp.float32)
    avhubert_features = jax.random.normal(kf, (B, T, AVHUBERT_DIM), jnp.float32)
    clean_articulatory = jax.random.normal(kca, (B, T, SPARC_DIM), jnp.float32)
    noisy_articulatory = jax.random.normal(kna, (B, T, SPARC_DIM), jnp.float32)

    raw_layers, w_dec, b_dec = init_params(
        kp, AVHUBERT_DIM + SPARC_DIM, HIDDEN, NUM_LAYERS, SPARC_DIM)
    pallas_params = prepare_pallas_params(
        raw_layers, w_dec, b_dec, HIDDEN, AVHUBERT_DIM + SPARC_DIM)

    out = forward(video, clean_audio, noise, avhubert_features,
                  clean_articulatory, noisy_articulatory,
                  pallas_params, HIDDEN, snr_db=SNR_DB)
    jax.block_until_ready(out)

    # correctness check against pure-JAX reference
    ref_pred, ref_noisy = _ref_forward(
        clean_audio, noise, avhubert_features, noisy_articulatory,
        raw_layers, w_dec, b_dec, HIDDEN, SNR_DB)
    assert jnp.allclose(out["noisy_audio"], ref_noisy, rtol=1e-3, atol=1e-3)
    assert jnp.allclose(out["predicted_articulatory"], ref_pred,
                        rtol=1e-2, atol=1e-2)

    print("KERNEL_OK")
</pallas_src>

<mosaic_0001>
module attributes {stable_mosaic.version = 11 : i64} {
  func.func @_add_noise_fused_kernel(%arg0: memref<2x1024xf32, #tpu.memory_space<vmem>>, %arg1: memref<2x1024xf32, #tpu.memory_space<vmem>>, %arg2: memref<2x1024xf32, #tpu.memory_space<vmem>>) attributes {dimension_semantics = [], scalar_prefetch = 0 : i64, scratch_operands = 0 : i64, tpu.core_type = #tpu.core_type<tc>} {
    %c0 = arith.constant 0 : index
    %c0_0 = arith.constant 0 : index
    %0 = vector.load %arg0[%c0, %c0_0] : memref<2x1024xf32, #tpu.memory_space<vmem>>, vector<2x1024xf32>
    %c0_1 = arith.constant 0 : index
    %c0_2 = arith.constant 0 : index
    %1 = vector.load %arg1[%c0_1, %c0_2] : memref<2x1024xf32, #tpu.memory_space<vmem>>, vector<2x1024xf32>
    %2 = arith.mulf %0, %0 : vector<2x1024xf32>
    %cst = arith.constant dense<0.000000e+00> : vector<2xf32>
    %3 = vector.multi_reduction <add>, %2, %cst [1] : vector<2x1024xf32> to vector<2xf32>
    %4 = vector.shape_cast %3 : vector<2xf32> to vector<2x1xf32>
    %5 = arith.mulf %1, %1 : vector<2x1024xf32>
    %cst_3 = arith.constant dense<0.000000e+00> : vector<2xf32>
    %6 = vector.multi_reduction <add>, %5, %cst_3 [1] : vector<2x1024xf32> to vector<2xf32>
    %7 = vector.shape_cast %6 : vector<2xf32> to vector<2x1xf32>
    %cst_4 = arith.constant 1.000000e-30 : f32
    %8 = vector.broadcast %cst_4 : f32 to vector<2x1xf32>
    %9 = arith.maximumf %7, %8 : vector<2x1xf32>
    %10 = arith.divf %4, %9 : vector<2x1xf32>
    %11 = math.sqrt %10 : vector<2x1xf32>
    %cst_5 = arith.constant 0.316227764 : f32
    %12 = vector.broadcast %cst_5 : f32 to vector<2x1xf32>
    %13 = arith.mulf %11, %12 : vector<2x1xf32>
    %14 = vector.broadcast %13 : vector<2x1xf32> to vector<2x1024xf32>
    %15 = arith.mulf %14, %1 : vector<2x1024xf32>
    %16 = arith.addf %0, %15 : vector<2x1024xf32>
    %c0_6 = arith.constant 0 : index
    %c0_7 = arith.constant 0 : index
    %17 = vector.load %arg2[%c0_6, %c0_7] : memref<2x1024xf32, #tpu.memory_space<vmem>>, vector<2x1024xf32>
    tpu.vector_store %arg2[%c0_6, %c0_7], %16 {strides = array<i32>} : memref<2x1024xf32, #tpu.memory_space<vmem>>, vector<2x1024xf32>,
    return
  }
}

</mosaic_0001>

<llo_original>
// kernel: tpu_custom_call.1
$region0: #{tpu_custom_call.1}
  #allocation0 [shape = 'u32[]', space=smem, size = 0x4, offset = 0x4, fixed_abs, tag = 'smem constant byte address 0x4 - core index']
  #allocation1 [shape = 'u32[144,128]{1,0:T(1,128)}', space=vmem, size = 0x12000, scoped, tag = 'internal scratch']
  %s0 = inlined_call_operand.hbm [shape: f32[2,1024], index: 0, kind: input, shape index: {}]
  %s1 = inlined_call_operand.hbm [shape: f32[2,1024], index: 1, kind: input, shape index: {}]
  %s2 = inlined_call_operand.hbm [shape: f32[2,1024], index: 2, kind: output, shape index: {}]
  %s3 = sld [smem:[#allocation0]]
  $region26: #{tpu_custom_call.1} parent=0
    _
  %s5 = ssub.s32 1, %s3
  %s6 = scalar_select 0, %s5, %s3
  $region1: #{tpu_custom_call.1} parent=0
    #allocation2 [shape = 'u8[8192]{0}', space=vmem, size = 0x2000, scoped, tag = 'input window, operand 0, single buffered']
    #allocation3 [shape = 's32[1]{0}', space=sflag, size = 0x4, scoped, tag = 'scoped memory for tpu_custom_call.1']
    #allocation4 [shape = 's32[1]{0}', space=sflag, size = 0x4, scoped, tag = 'scoped memory for tpu_custom_call.1']
    #allocation5 [shape = 'u8[8192]{0}', space=vmem, size = 0x2000, scoped, tag = 'input window, operand 1, single buffered']
    #allocation6 [shape = 's32[1]{0}', space=sflag, size = 0x4, scoped, tag = 'scoped memory for tpu_custom_call.1']
    #allocation7 [shape = 'u8[8192]{0}', space=vmem, size = 0x2000, scoped, tag = 'output window, operand 0, single buffered']
    %7 = vsyncpa [#allocation3], 0
    %8 = vsyncpa [#allocation6], 0
    %9 = vsyncpa [#allocation4], 0
    // Predicated region
    $region2: #{tpu_custom_call.1} parent=1 // pred_check
      _
    $region3: #{tpu_custom_call.1} parent=1 // pred_check_branch
      %11 = sbr.rel (0) target = $region5
    $region4: #{tpu_custom_call.1} parent=1 // pred_region
      %s13 = ssub.s32 256, 256
      %14 = vsyncadd [#allocation3], %s13
      %s16 = sshll.u32 [#allocation2], 4
      %s17 = int_to_ptr.vmem [resolvable:$true] %s16
      %19 = dma.hbm_to_vmem [thread:$0]  %s0, 256, %s17, [#allocation3]
    $region5: #{tpu_custom_call.1} parent=1 // pred_fallthru
      _
    // Predicated region
    $region6: #{tpu_custom_call.1} parent=1 // pred_check
      _
    $region7: #{tpu_custom_call.1} parent=1 // pred_check_branch
      %21 = sbr.rel (0) target = $region9
    $region8: #{tpu_custom_call.1} parent=1 // pred_region
      %s23 = ssub.s32 256, 256
      %24 = vsyncadd [#allocation6], %s23
      %s26 = sshll.u32 [#allocation5], 4
      %s27 = int_to_ptr.vmem [resolvable:$true] %s26
      %29 = dma.hbm_to_vmem [thread:$0]  %s1, 256, %s27, [#allocation6]
    $region9: #{tpu_custom_call.1} parent=1 // pred_fallthru
      _
    // Predicated region
    $region10: #{tpu_custom_call.1} parent=1 // pred_check
      _
    $region11: #{tpu_custom_call.1} parent=1 // pred_check_branch
      %31 = sbr.rel (0) target = $region13
    $region12: #{tpu_custom_call.1} parent=1 // pred_region
      %32 = dma.done [#allocation3], 256
    $region13: #{tpu_custom_call.1} parent=1 // pred_fallthru
      _
    // Predicated region
    $region14: #{tpu_custom_call.1} parent=1 // pred_check
      _
    $region15: #{tpu_custom_call.1} parent=1 // pred_check_branch
      %34 = sbr.rel (0) target = $region17
    $region16: #{tpu_custom_call.1} parent=1 // pred_region
      %35 = dma.done [#allocation6], 256
    $region17: #{tpu_custom_call.1} parent=1 // pred_fallthru
      _
    %v36 = vld [vmem:[#allocation2] sm:$0xff]
    %v37 = vld [vmem:[#allocation2 + $0x8] sm:$0xff]
    %v38 = vld [vmem:[#allocation5] sm:$0xff]
    %v39 = vld [vmem:[#allocation5 + $0x8] sm:$0xff]
    %v40 = vmul.f32 %v36, %v36
    %v41 = vmul.f32 %v37, %v37
    %v44 = vcombine.high %v40, %v40
    %v46 = vunpack.c.l.s4 1983009808
    %v47 = vunpack.c.0.s8 %v46
    %v48 = vlaneseq
    %v49 = vshrl.u32 %v48, 7
    %v50 = vsub.s32 %v47, %v49
    %v51 = vrot.slane %v40, %v50
    %v53 = vunpack.c.l.s4 1983009808
    %v54 = vunpack.c.0.s8 %v53
    %v55 = vlaneseq
    %v56 = vshrl.u32 %v55, 7
    %v57 = vsub.s32 %v54, %v56
    %v58 = vrot.slane %v44, %v57
    %v59 = vcombine.high %v51, %v51
    %v60 = vcombine.high %v58, %v58
    %v61 = vcombine.high %v41, %v41
    %v63 = vunpack.c.l.s4 1983009808
    %v64 = vunpack.c.0.s8 %v63
    %v65 = vlaneseq
    %v66 = vshrl.u32 %v65, 7
    %v67 = vsub.s32 %v64, %v66
    %v68 = vrot.slane %v41, %v67
    %v70 = vunpack.c.l.s4 1983009808
    %v71 = vunpack.c.0.s8 %v70
    %v72 = vlaneseq
    %v73 = vshrl.u32 %v72, 7
    %v74 = vsub.s32 %v71, %v73
    %v75 = vrot.slane %v61, %v74
    %v76 = vcombine.high %v68, %v68
    %v77 = vcombine.high %v75, %v75
    %vm86 = vcmask 1041408
    %v87 = vsel %vm86, %v51, 0.0
    %v88 = vsel %vm86, %v59, 0.0
    %v89 = vadd.f32 %v87, %v88
    %v90 = vsel %vm86, %v58, 0.0
    %v91 = vadd.f32 %v89, %v90
    %v92 = vsel %vm86, %v60, 0.0
    %v93 = vadd.f32 %v91, %v92
    %v94 = vsel %vm86, %v68, 0.0
    %v95 = vadd.f32 %v93, %v94
    %v96 = vsel %vm86, %v76, 0.0
    %v97 = vadd.f32 %v95, %v96
    %v98 = vsel %vm86, %v75, 0.0
    %v99 = vadd.f32 %v97, %v98
    %v100 = vsel %vm86, %v77, 0.0
    %v101 = vadd.f32 %v99, %v100
    %102 = vadd.xlane.f32.xlu0 %v101
    %v103 = vpop.xlane.xlu0 %102
    %v104 = vmul.f32 %v38, %v38
    %v105 = vmul.f32 %v39, %v39
    %v108 = vcombine.high %v104, %v104
    %v110 = vunpack.c.l.s4 1983009808
    %v111 = vunpack.c.0.s8 %v110
    %v112 = vlaneseq
    %v113 = vshrl.u32 %v112, 7
    %v114 = vsub.s32 %v111, %v113
    %v115 = vrot.slane %v104, %v114
    %v117 = vunpack.c.l.s4 1983009808
    %v118 = vunpack.c.0.s8 %v117
    %v119 = vlaneseq
    %v120 = vshrl.u32 %v119, 7
    %v121 = vsub.s32 %v118, %v120
    %v122 = vrot.slane %v108, %v121
    %v123 = vcombine.high %v115, %v115
    %v124 = vcombine.high %v122, %v122
    %v125 = vcombine.high %v105, %v105
    %v127 = vunpack.c.l.s4 1983009808
    %v128 = vunpack.c.0.s8 %v127
    %v129 = vlaneseq
    %v130 = vshrl.u32 %v129, 7
    %v131 = vsub.s32 %v128, %v130
    %v132 = vrot.slane %v105, %v131
    %v134 = vunpack.c.l.s4 1983009808
    %v135 = vunpack.c.0.s8 %v134
    %v136 = vlaneseq
    %v137 = vshrl.u32 %v136, 7
    %v138 = vsub.s32 %v135, %v137
    %v139 = vrot.slane %v125, %v138
    %v140 = vcombine.high %v132, %v132
    %v141 = vcombine.high %v139, %v139
    %v150 = vsel %vm86, %v115, 0.0
    %v151 = vsel %vm86, %v123, 0.0
    %v152 = vadd.f32 %v150, %v151
    %v153 = vsel %vm86, %v122, 0.0
    %v154 = vadd.f32 %v152, %v153
    %v155 = vsel %vm86, %v124, 0.0
    %v156 = vadd.f32 %v154, %v155
    %v157 = vsel %vm86, %v132, 0.0
    %v158 = vadd.f32 %v156, %v157
    %v159 = vsel %vm86, %v140, 0.0
    %v160 = vadd.f32 %v158, %v159
    %v161 = vsel %vm86, %v139, 0.0
    %v162 = vadd.f32 %v160, %v161
    %v163 = vsel %vm86, %v141, 0.0
    %v164 = vadd.f32 %v162, %v163
    %165 = vadd.xlane.f32.xlu0 %v164
    %v166 = vpop.xlane.xlu0 %165
    %v167 = vmax.f32 %v166, 1e-30
    %v168 = vrcp.pop %v167
    %v169 = vmul.f32 %v103, %v168
    %v170 = vrsqrt.pop %v169
    %v171 = vmul.f32 %v169, %v170
    %vm172 = vcmp.eq.f32.partialorder %v169, inf
    %v173 = vsel %vm172, %v169, %v171
    %vm174 = vcmp.eq.f32.partialorder %v169, 0.0
    %v175 = vand.u32 %v169, 2147483648
    %v176 = vsel %vm174, %v175, %v173
    %v177 = vmul.f32 %v176, 0.31622776
    %v180 = vcombine.high %v38, %v38
    %v182 = vunpack.c.l.s4 1983009808
    %v183 = vunpack.c.0.s8 %v182
    %v184 = vlaneseq
    %v185 = vshrl.u32 %v184, 7
    %v186 = vsub.s32 %v183, %v185
    %v187 = vrot.slane %v38, %v186
    %v189 = vunpack.c.l.s4 1983009808
    %v190 = vunpack.c.0.s8 %v189
    %v191 = vlaneseq
    %v192 = vshrl.u32 %v191, 7
    %v193 = vsub.s32 %v190, %v192
    %v194 = vrot.slane %v180, %v193
    %v195 = vcombine.high %v187, %v187
    %v196 = vcombine.high %v194, %v194
    %v197 = vcombine.high %v39, %v39
    %v199 = vunpack.c.l.s4 1983009808
    %v200 = vunpack.c.0.s8 %v199
    %v201 = vlaneseq
    %v202 = vshrl.u32 %v201, 7
    %v203 = vsub.s32 %v200, %v202
    %v204 = vrot.slane %v39, %v203
    %v206 = vunpack.c.l.s4 1983009808
    %v207 = vunpack.c.0.s8 %v206
    %v208 = vlaneseq
    %v209 = vshrl.u32 %v208, 7
    %v210 = vsub.s32 %v207, %v209
    %v211 = vrot.slane %v197, %v210
    %v212 = vcombine.high %v204, %v204
    %v213 = vcombine.high %v211, %v211
    %v222 = vmul.f32 %v177, %v187
    %v223 = vmul.f32 %v177, %v195
    %v224 = vmul.f32 %v177, %v194
    %v225 = vmul.f32 %v177, %v196
    %v226 = vmul.f32 %v177, %v204
    %v227 = vmul.f32 %v177, %v212
    %v228 = vmul.f32 %v177, %v211
    %v229 = vmul.f32 %v177, %v213
    %v238 = vcombine.low %v222, %v223
    %v239 = vcombine.low %v224, %v225
    %v241 = vunpack.c.l.s4 1983009808
    %v242 = vunpack.c.0.s8 %v241
    %v243 = vlaneseq
    %v244 = vshrl.u32 %v243, 7
    %v245 = vsub.s32 %v242, %v244
    %v246 = vrot.slane %v238, %v245
    %v248 = vunpack.c.l.s4 1983009808
    %v249 = vunpack.c.0.s8 %v248
    %v250 = vlaneseq
    %v251 = vshrl.u32 %v250, 7
    %v252 = vsub.s32 %v249, %v251
    %v253 = vrot.slane %v239, %v252
    %v254 = vcombine.low %v246, %v253
    %v255 = vcombine.low %v226, %v227
    %v256 = vcombine.low %v228, %v229
    %v258 = vunpack.c.l.s4 1983009808
    %v259 = vunpack.c.0.s8 %v258
    %v260 = vlaneseq
    %v261 = vshrl.u32 %v260, 7
    %v262 = vsub.s32 %v259, %v261
    %v263 = vrot.slane %v255, %v262
    %v265 = vunpack.c.l.s4 1983009808
    %v266 = vunpack.c.0.s8 %v265
    %v267 = vlaneseq
    %v268 = vshrl.u32 %v267, 7
    %v269 = vsub.s32 %v266, %v268
    %v270 = vrot.slane %v256, %v269
    %v271 = vcombine.low %v263, %v270
    %v274 = vadd.f32 %v36, %v254
    %v275 = vadd.f32 %v37, %v271
    %276 = vst [vmem:[#allocation7] sm:$0xff] %v274
    %277 = vst [vmem:[#allocation7 + $0x8] sm:$0xff] %v275
    // Predicated region
    $region18: #{tpu_custom_call.1} parent=1 // pred_check
      _
    $region19: #{tpu_custom_call.1} parent=1 // pred_check_branch
      %279 = sbr.rel (0) target = $region21
    $region20: #{tpu_custom_call.1} parent=1 // pred_region
      %s281 = ssub.s32 256, 256
      %282 = vsyncadd [#allocation4], %s281
      %s284 = sshll.u32 [#allocation7], 4
      %s285 = int_to_ptr.vmem [resolvable:$true] %s284
      %287 = dma.vmem_to_hbm [thread:$0]  %s285, 256, %s2, [#allocation4]
    $region21: #{tpu_custom_call.1} parent=1 // pred_fallthru
      _
    // Predicated region
    $region22: #{tpu_custom_call.1} parent=1 // pred_check
      _
    $region23: #{tpu_custom_call.1} parent=1 // pred_check_branch
      %289 = sbr.rel (0) target = $region25
    $region24: #{tpu_custom_call.1} parent=1 // pred_region
      %290 = dma.done [#allocation4], 256
    $region25: #{tpu_custom_call.1} parent=1 // pred_fallthru
      _
    %291 = vsyncpa [#allocation3], 1
    %292 = vsyncpa [#allocation6], 1
    %293 = vsyncpa [#allocation4], 1

</llo_original>
